<compile_context>
chip_gen: v5e
topology: v5e:2x2
jax: 0.10.0
libtpu: 0.0.40
codegen_flags: <defaults>
</compile_context>

<pallas_src>
import functools
import math

import jax
import jax.numpy as jnp
from jax.experimental import pallas as pl
from jax.experimental.pallas import tpu as pltpu


_COEFS = (0.005, 0.01, 0.05)
_EPS = 1e-8


# ------------------------------------------------------------------
# Fused kernel: BCE partial sum + 3x sum(log(attn + eps)) partial sums
# ------------------------------------------------------------------
def _fused_loss_kernel(scores_ref, masks_ref, attn_ref, out_ref, acc_ref, *,
                       batch, tile_b):
    i = pl.program_id(0)

    @pl.when(i == 0)
    def _init():
        for k in range(4):
            acc_ref[k] = jnp.float32(0.0)

    x = scores_ref[...].astype(jnp.float32)
    y = masks_ref[...].astype(jnp.float32)

    # Mask rows past the true batch size (remainder tile safety).
    row = jax.lax.broadcasted_iota(jnp.int32, x.shape, 0) + i * tile_b
    valid = row < batch

    # Numerically stable BCE-with-logits: max(x,0) - x*y + log1p(exp(-|x|))
    bce = jnp.maximum(x, 0.0) - x * y + jnp.log1p(jnp.exp(-jnp.abs(x)))
    acc_ref[0] += jnp.sum(jnp.where(valid, bce, 0.0))

    # Per attn tensor: partial sum of log(attn + eps). The rest of the KL
    # (u*log(u) - u*mean(...)) is folded into host-side constants.
    for k in range(3):
        a = attn_ref[k].astype(jnp.float32)
        log_a = jnp.log(a + _EPS)
        acc_ref[k + 1] += jnp.sum(jnp.where(valid, log_a, 0.0))

    @pl.when(i == pl.num_programs(0) - 1)
    def _finalize():
        for k in range(4):
            out_ref[k] = acc_ref[k]


def _pick_tile_rows(B, P, budget_bytes=16 * 1024 * 1024):
    """Tile height: 5 f32 streams x 2 (double buffer) x TB x P x 4B <= budget."""
    max_rows = max(budget_bytes // (5 * 2 * P * 4), 8)
    if B <= max_rows:
        return B                      # full batch in one block (small case)
    return (max_rows // 8) * 8        # multiple of 8 satisfies sublane tiling


def fused_loss_partials(scores, masks, attn_stacked):
    """Returns f32[4]: [sum(bce), sum(log(a0+eps)), sum(log(a1+eps)), sum(log(a2+eps))]."""
    B, P = scores.shape
    tb = _pick_tile_rows(B, P)
    grid = (pl.cdiv(B, tb),)
    kernel = functools.partial(_fused_loss_kernel, batch=B, tile_b=tb)
    return pl.pallas_call(
        kernel,
        out_shape=jax.ShapeDtypeStruct((4,), jnp.float32),
        grid=grid,
        in_specs=[
            pl.BlockSpec((tb, P), lambda i: (i, 0)),
            pl.BlockSpec((tb, P), lambda i: (i, 0)),
            pl.BlockSpec((3, tb, P), lambda i: (0, i, 0)),
        ],
        out_specs=pl.BlockSpec(memory_space=pltpu.MemorySpace.SMEM),
        scratch_shapes=[pltpu.SMEM((4,), jnp.float32)],
        compiler_params=pltpu.CompilerParams(
            dimension_semantics=("arbitrary",),
            vmem_limit_bytes=32 * 1024 * 1024,
        ),
    )(scores, masks, attn_stacked)


# ------------------------------------------------------------------
# Loss "module"
# ------------------------------------------------------------------
class Loss:
    def __init__(self, reg_type, num_patches):
        self.reg_type = reg_type
        self.num_patches = num_patches
        self.coefs = list(_COEFS)
        # TODO(synk): only reg_type == 'KL_divergence' is implemented in Pallas;
        # 'L2_norm', 'soft_R', 'R' regularizer branches are not exercised here.

    def __call__(self, scores, masks, attn_weights=None):
        B, P = scores.shape
        use_kl = attn_weights is not None and self.reg_type == 'KL_divergence'

        if use_kl:
            attn_stacked = jnp.stack(
                [a.astype(jnp.float32) for a in attn_weights], axis=0)
        else:
            # Dummy (ones) attn so the single fused kernel can still run;
            # its partials are simply ignored below.
            attn_stacked = jnp.ones((3, B, P), dtype=jnp.float32)

        partials = fused_loss_partials(scores, masks, attn_stacked)

        # mean over batch of per-image sums == total_sum / B
        loss = partials[0] / jnp.float32(B)

        if not use_kl:
            return loss

        u = 1.0 / self.num_patches
        u_log_u = jnp.float32(u * math.log(u))
        n_elem = jnp.float32(B * P)
        reg = jnp.float32(0.0)
        for k in range(3):
            mean_log = partials[1 + k] / n_elem
            kl = u_log_u - jnp.float32(u) * mean_log
            reg = reg + jnp.float32(self.coefs[k]) * kl
        return loss + reg


# ------------------------------------------------------------------
# Driver
# ------------------------------------------------------------------
if __name__ == "__main__":
    key = jax.random.PRNGKey(0)
    B, P = 2, 8                       # batch, num_patches

    k1, k2, k3, k4, k5 = jax.random.split(key, 5)
    scores = jax.random.normal(k1, (B, P), dtype=jnp.float32)
    masks = jax.random.bernoulli(k2, 0.5, (B, P)).astype(jnp.float32)
    attn_weights = [
        jax.nn.softmax(jax.random.normal(k, (B, P), dtype=jnp.float32), axis=-1)
        for k in (k3, k4, k5)
    ]

    loss_mod = Loss(reg_type='KL_divergence', num_patches=P)
    total_loss = loss_mod(scores, masks, attn_weights)
    total_loss = jax.block_until_ready(total_loss)

    # sanity check against a pure-JAX reference
    x, y = scores, masks
    ref_bce = jnp.mean(
        jnp.sum(jnp.maximum(x, 0.0) - x * y + jnp.log1p(jnp.exp(-jnp.abs(x))), axis=1)
    )
    u = 1.0 / P
    ref_reg = sum(
        c * jnp.mean(u * (jnp.log(u) - jnp.log(a + 1e-8)))
        for c, a in zip([0.005, 0.01, 0.05], attn_weights)
    )
    ref = ref_bce + ref_reg
    assert jnp.allclose(total_loss, ref, rtol=1e-5, atol=1e-5), (total_loss, ref)

    print("KERNEL_OK")
</pallas_src>

<mosaic_0001>
module attributes {stable_mosaic.version = 11 : i64} {
  func.func @_fused_loss_kernel(%arg0: i32, %arg1: memref<2x8xf32, #tpu.memory_space<vmem>>, %arg2: memref<2x8xf32, #tpu.memory_space<vmem>>, %arg3: memref<3x2x8xf32, #tpu.memory_space<vmem>>, %arg4: memref<4xf32, #tpu.memory_space<smem>>, %arg5: memref<4xf32, #tpu.memory_space<smem>>) attributes {dimension_semantics = [#tpu.dimension_semantics<arbitrary>], iteration_bounds = array<i64: 1>, scalar_prefetch = 0 : i64, scratch_operands = 1 : i64, tpu.core_type = #tpu.core_type<tc>, window_params = [{transform_indices = @transform_0, window_bounds = array<i64: 2, 8>}, {transform_indices = @transform_1, window_bounds = array<i64: 2, 8>}, {transform_indices = @transform_2, window_bounds = array<i64: 3, 2, 8>}, {transform_indices = @transform_3, window_bounds = array<i64: 4>}]} {
    %c0_i32 = arith.constant 0 : i32
    %0 = arith.cmpi eq, %arg0, %c0_i32 : i32
    %1 = arith.extui %0 : i1 to i32
    %c0_i32_0 = arith.constant 0 : i32
    %2 = arith.cmpi ne, %1, %c0_i32_0 : i32
    scf.if %2 {
      %cst_33 = arith.constant 0.000000e+00 : f32
      %c0_34 = arith.constant 0 : index
      %75 = memref.load %arg5[%c0_34] : memref<4xf32, #tpu.memory_space<smem>>
      memref.store %cst_33, %arg5[%c0_34] : memref<4xf32, #tpu.memory_space<smem>>
      %cst_35 = arith.constant 0.000000e+00 : f32
      %c1_36 = arith.constant 1 : index
      %76 = memref.load %arg5[%c1_36] : memref<4xf32, #tpu.memory_space<smem>>
      memref.store %cst_35, %arg5[%c1_36] : memref<4xf32, #tpu.memory_space<smem>>
      %cst_37 = arith.constant 0.000000e+00 : f32
      %c2_38 = arith.constant 2 : index
      %77 = memref.load %arg5[%c2_38] : memref<4xf32, #tpu.memory_space<smem>>
      memref.store %cst_37, %arg5[%c2_38] : memref<4xf32, #tpu.memory_space<smem>>
      %cst_39 = arith.constant 0.000000e+00 : f32
      %c3_40 = arith.constant 3 : index
      %78 = memref.load %arg5[%c3_40] : memref<4xf32, #tpu.memory_space<smem>>
      memref.store %cst_39, %arg5[%c3_40] : memref<4xf32, #tpu.memory_space<smem>>
    } else {
    }
    %c0 = arith.constant 0 : index
    %c0_1 = arith.constant 0 : index
    %3 = vector.load %arg1[%c0, %c0_1] : memref<2x8xf32, #tpu.memory_space<vmem>>, vector<2x8xf32>
    %c0_2 = arith.constant 0 : index
    %c0_3 = arith.constant 0 : index
    %4 = vector.load %arg2[%c0_2, %c0_3] : memref<2x8xf32, #tpu.memory_space<vmem>>, vector<2x8xf32>
    %5 = tpu.iota {dimensions = array<i32: 0>} : vector<2x8xi32>
    %c2_i32 = arith.constant 2 : i32
    %6 = arith.muli %arg0, %c2_i32 : i32
    %7 = vector.broadcast %6 : i32 to vector<2x8xi32>
    %8 = arith.addi %5, %7 : vector<2x8xi32>
    %c2_i32_4 = arith.constant 2 : i32
    %9 = vector.broadcast %c2_i32_4 : i32 to vector<2x8xi32>
    %10 = arith.cmpi slt, %8, %9 : vector<2x8xi32>
    %cst = arith.constant 0.000000e+00 : f32
    %11 = vector.broadcast %cst : f32 to vector<2x8xf32>
    %12 = arith.maximumf %3, %11 : vector<2x8xf32>
    %13 = arith.mulf %3, %4 : vector<2x8xf32>
    %14 = arith.subf %12, %13 : vector<2x8xf32>
    %15 = math.absf %3 : vector<2x8xf32>
    %cst_5 = arith.constant 0.000000e+00 : f32
    %16 = vector.broadcast %cst_5 : f32 to vector<2x8xf32>
    %17 = arith.subf %16, %15 : vector<2x8xf32>
    %18 = math.exp %17 : vector<2x8xf32>
    %19 = math.log1p %18 : vector<2x8xf32>
    %20 = arith.addf %14, %19 : vector<2x8xf32>
    %c0_6 = arith.constant 0 : index
    %21 = memref.load %arg5[%c0_6] : memref<4xf32, #tpu.memory_space<smem>>
    %cst_7 = arith.constant 0.000000e+00 : f32
    %22 = vector.broadcast %cst_7 : f32 to vector<2x8xf32>
    %23 = arith.select %10, %20, %22 : vector<2x8xi1>, vector<2x8xf32>
    %24 = vector.shape_cast %23 : vector<2x8xf32> to vector<1x2x8xf32>
    %cst_8 = arith.constant dense<0.000000e+00> : vector<1xf32>
    %25 = vector.multi_reduction <add>, %24, %cst_8 [1, 2] : vector<1x2x8xf32> to vector<1xf32>
    %26 = vector.shape_cast %25 : vector<1xf32> to vector<1x1x1xf32>
    %27 = vector.extract %26[0, 0, 0] : f32 from vector<1x1x1xf32>
    %28 = arith.addf %21, %27 : f32
    %c0_9 = arith.constant 0 : index
    %29 = memref.load %arg5[%c0_9] : memref<4xf32, #tpu.memory_space<smem>>
    memref.store %28, %arg5[%c0_9] : memref<4xf32, #tpu.memory_space<smem>>
    %c0_10 = arith.constant 0 : index
    %c0_11 = arith.constant 0 : index
    %c0_12 = arith.constant 0 : index
    %30 = vector.load %arg3[%c0_10, %c0_11, %c0_12] : memref<3x2x8xf32, #tpu.memory_space<vmem>>, vector<1x2x8xf32>
    %31 = vector.shape_cast %30 : vector<1x2x8xf32> to vector<2x8xf32>
    %cst_13 = arith.constant 9.99999993E-9 : f32
    %32 = vector.broadcast %cst_13 : f32 to vector<2x8xf32>
    %33 = arith.addf %31, %32 : vector<2x8xf32>
    %34 = math.log %33 : vector<2x8xf32>
    %c1 = arith.constant 1 : index
    %35 = memref.load %arg5[%c1] : memref<4xf32, #tpu.memory_space<smem>>
    %cst_14 = arith.constant 0.000000e+00 : f32
    %36 = vector.broadcast %cst_14 : f32 to vector<2x8xf32>
    %37 = arith.select %10, %34, %36 : vector<2x8xi1>, vector<2x8xf32>
    %38 = vector.shape_cast %37 : vector<2x8xf32> to vector<1x2x8xf32>
    %cst_15 = arith.constant dense<0.000000e+00> : vector<1xf32>
    %39 = vector.multi_reduction <add>, %38, %cst_15 [1, 2] : vector<1x2x8xf32> to vector<1xf32>
    %40 = vector.shape_cast %39 : vector<1xf32> to vector<1x1x1xf32>
    %41 = vector.extract %40[0, 0, 0] : f32 from vector<1x1x1xf32>
    %42 = arith.addf %35, %41 : f32
    %c1_16 = arith.constant 1 : index
    %43 = memref.load %arg5[%c1_16] : memref<4xf32, #tpu.memory_space<smem>>
    memref.store %42, %arg5[%c1_16] : memref<4xf32, #tpu.memory_space<smem>>
    %c1_17 = arith.constant 1 : index
    %c0_18 = arith.constant 0 : index
    %c0_19 = arith.constant 0 : index
    %44 = vector.load %arg3[%c1_17, %c0_18, %c0_19] : memref<3x2x8xf32, #tpu.memory_space<vmem>>, vector<1x2x8xf32>
    %45 = vector.shape_cast %44 : vector<1x2x8xf32> to vector<2x8xf32>
    %cst_20 = arith.constant 9.99999993E-9 : f32
    %46 = vector.broadcast %cst_20 : f32 to vector<2x8xf32>
    %47 = arith.addf %45, %46 : vector<2x8xf32>
    %48 = math.log %47 : vector<2x8xf32>
    %c2 = arith.constant 2 : index
    %49 = memref.load %arg5[%c2] : memref<4xf32, #tpu.memory_space<smem>>
    %cst_21 = arith.constant 0.000000e+00 : f32
    %50 = vector.broadcast %cst_21 : f32 to vector<2x8xf32>
    %51 = arith.select %10, %48, %50 : vector<2x8xi1>, vector<2x8xf32>
    %52 = vector.shape_cast %51 : vector<2x8xf32> to vector<1x2x8xf32>
    %cst_22 = arith.constant dense<0.000000e+00> : vector<1xf32>
    %53 = vector.multi_reduction <add>, %52, %cst_22 [1, 2] : vector<1x2x8xf32> to vector<1xf32>
    %54 = vector.shape_cast %53 : vector<1xf32> to vector<1x1x1xf32>
    %55 = vector.extract %54[0, 0, 0] : f32 from vector<1x1x1xf32>
    %56 = arith.addf %49, %55 : f32
    %c2_23 = arith.constant 2 : index
    %57 = memref.load %arg5[%c2_23] : memref<4xf32, #tpu.memory_space<smem>>
    memref.store %56, %arg5[%c2_23] : memref<4xf32, #tpu.memory_space<smem>>
    %c2_24 = arith.constant 2 : index
    %c0_25 = arith.constant 0 : index
    %c0_26 = arith.constant 0 : index
    %58 = vector.load %arg3[%c2_24, %c0_25, %c0_26] : memref<3x2x8xf32, #tpu.memory_space<vmem>>, vector<1x2x8xf32>
    %59 = vector.shape_cast %58 : vector<1x2x8xf32> to vector<2x8xf32>
    %cst_27 = arith.constant 9.99999993E-9 : f32
    %60 = vector.broadcast %cst_27 : f32 to vector<2x8xf32>
    %61 = arith.addf %59, %60 : vector<2x8xf32>
    %62 = math.log %61 : vector<2x8xf32>
    %c3 = arith.constant 3 : index
    %63 = memref.load %arg5[%c3] : memref<4xf32, #tpu.memory_space<smem>>
    %cst_28 = arith.constant 0.000000e+00 : f32
    %64 = vector.broadcast %cst_28 : f32 to vector<2x8xf32>
    %65 = arith.select %10, %62, %64 : vector<2x8xi1>, vector<2x8xf32>
    %66 = vector.shape_cast %65 : vector<2x8xf32> to vector<1x2x8xf32>
    %cst_29 = arith.constant dense<0.000000e+00> : vector<1xf32>
    %67 = vector.multi_reduction <add>, %66, %cst_29 [1, 2] : vector<1x2x8xf32> to vector<1xf32>
    %68 = vector.shape_cast %67 : vector<1xf32> to vector<1x1x1xf32>
    %69 = vector.extract %68[0, 0, 0] : f32 from vector<1x1x1xf32>
    %70 = arith.addf %63, %69 : f32
    %c3_30 = arith.constant 3 : index
    %71 = memref.load %arg5[%c3_30] : memref<4xf32, #tpu.memory_space<smem>>
    memref.store %70, %arg5[%c3_30] : memref<4xf32, #tpu.memory_space<smem>>
    %c0_i32_31 = arith.constant 0 : i32
    %72 = arith.cmpi eq, %arg0, %c0_i32_31 : i32
    %73 = arith.extui %72 : i1 to i32
    %c0_i32_32 = arith.constant 0 : i32
    %74 = arith.cmpi ne, %73, %c0_i32_32 : i32
    scf.if %74 {
      %c0_33 = arith.constant 0 : index
      %75 = memref.load %arg5[%c0_33] : memref<4xf32, #tpu.memory_space<smem>>
      %c0_34 = arith.constant 0 : index
      %76 = memref.load %arg4[%c0_34] : memref<4xf32, #tpu.memory_space<smem>>
      memref.store %75, %arg4[%c0_34] : memref<4xf32, #tpu.memory_space<smem>>
      %c1_35 = arith.constant 1 : index
      %77 = memref.load %arg5[%c1_35] : memref<4xf32, #tpu.memory_space<smem>>
      %c1_36 = arith.constant 1 : index
      %78 = memref.load %arg4[%c1_36] : memref<4xf32, #tpu.memory_space<smem>>
      memref.store %77, %arg4[%c1_36] : memref<4xf32, #tpu.memory_space<smem>>
      %c2_37 = arith.constant 2 : index
      %79 = memref.load %arg5[%c2_37] : memref<4xf32, #tpu.memory_space<smem>>
      %c2_38 = arith.constant 2 : index
      %80 = memref.load %arg4[%c2_38] : memref<4xf32, #tpu.memory_space<smem>>
      memref.store %79, %arg4[%c2_38] : memref<4xf32, #tpu.memory_space<smem>>
      %c3_39 = arith.constant 3 : index
      %81 = memref.load %arg5[%c3_39] : memref<4xf32, #tpu.memory_space<smem>>
      %c3_40 = arith.constant 3 : index
      %82 = memref.load %arg4[%c3_40] : memref<4xf32, #tpu.memory_space<smem>>
      memref.store %81, %arg4[%c3_40] : memref<4xf32, #tpu.memory_space<smem>>
    } else {
    }
    return
  }
  func.func @transform_0(%arg0: i32) -> (i32, i32) {
    %c0_i32 = arith.constant 0 : i32
    %c0_i32_0 = arith.constant 0 : i32
    return %arg0, %c0_i32 : i32, i32
  }
  func.func @transform_1(%arg0: i32) -> (i32, i32) {
    %c0_i32 = arith.constant 0 : i32
    %c0_i32_0 = arith.constant 0 : i32
    return %arg0, %c0_i32 : i32, i32
  }
  func.func @transform_2(%arg0: i32) -> (i32, i32, i32) {
    %c0_i32 = arith.constant 0 : i32
    %c0_i32_0 = arith.constant 0 : i32
    %c0_i32_1 = arith.constant 0 : i32
    return %c0_i32, %arg0, %c0_i32_0 : i32, i32, i32
  }
  func.func @transform_3(%arg0: i32) -> i32 {
    %c0_i32 = arith.constant 0 : i32
    %c0_i32_0 = arith.constant 0 : i32
    return %c0_i32 : i32
  }
}

</mosaic_0001>

<llo_original>
// kernel: tpu_custom_call.1
$region0: #{tpu_custom_call.1}
  #allocation0 [shape = 'u32[]', space=smem, size = 0x4, offset = 0x4, fixed_abs, tag = 'smem constant byte address 0x4 - core index']
  #allocation1 [shape = 'u32[72,128]{1,0:T(1,128)}', space=vmem, size = 0x9000, scoped, tag = 'internal scratch']
  #allocation2 [shape = 'f32[4]{0:T(128)}', space=smem, size = 0x200, scoped, tag = 'scratch operand']
  %s0 = inlined_call_operand.hbm [shape: f32[2,8], index: 0, kind: input, shape index: {}]
  %s1 = inlined_call_operand.hbm [shape: f32[2,8], index: 1, kind: input, shape index: {}]
  %s2 = inlined_call_operand.hbm [shape: f32[3,2,8], index: 2, kind: input, shape index: {}]
  %s3 = inlined_call_operand.hbm [shape: f32[4], index: 3, kind: output, shape index: {}]
  %s4 = sld [smem:[#allocation0]]
  $region42: #{tpu_custom_call.1} parent=0
    _
  %s6 = ssub.s32 1, %s4
  %s7 = scalar_select 0, %s6, %s4
  $region1: #{tpu_custom_call.1} parent=0
    #allocation3 [shape = 'u8[1024]{0}', space=vmem, size = 0x400, scoped, tag = 'input window, operand 0, single buffered']
    #allocation4 [shape = 's32[1]{0}', space=sflag, size = 0x4, scoped, tag = 'scoped memory for tpu_custom_call.1']
    #allocation5 [shape = 's32[1]{0}', space=sflag, size = 0x4, scoped, tag = 'scoped memory for tpu_custom_call.1']
    #allocation6 [shape = 'u8[1024]{0}', space=vmem, size = 0x400, scoped, tag = 'input window, operand 1, single buffered']
    #allocation7 [shape = 's32[1]{0}', space=sflag, size = 0x4, scoped, tag = 'scoped memory for tpu_custom_call.1']
    #allocation8 [shape = 'u8[3072]{0}', space=vmem, size = 0xc00, scoped, tag = 'input window, operand 2, single buffered']
    #allocation9 [shape = 'u8[512]{0}', space=smem, size = 0x200, scoped, tag = 'output window, operand 0, single buffered']
    %8 = vsyncpa [#allocation4], 0
    %9 = vsyncpa [#allocation7], 0
    %10 = vsyncpa [#allocation5], 0
    // Predicated region
    $region2: #{tpu_custom_call.1} parent=1 // pred_check
      _
    $region3: #{tpu_custom_call.1} parent=1 // pred_check_branch
      %12 = sbr.rel (0) target = $region5
    $region4: #{tpu_custom_call.1} parent=1 // pred_region
      %14 = vsyncadd [#allocation4], 0
      %s16 = sshll.u32 %s0, 4
      %s17 = int_to_ptr.hbm [resolvable:$true] %s16
      %s18 = sshll.u32 [#allocation3], 4
      %s19 = int_to_ptr.vmem [resolvable:$true] %s18
      %21 = dma.hbm_to_vmem [thread:$0]  %s17, 32, %s19, [#allocation4]
    $region5: #{tpu_custom_call.1} parent=1 // pred_fallthru
      _
    // Predicated region
    $region6: #{tpu_custom_call.1} parent=1 // pred_check
      _
    $region7: #{tpu_custom_call.1} parent=1 // pred_check_branch
      %23 = sbr.rel (0) target = $region9
    $region8: #{tpu_custom_call.1} parent=1 // pred_region
      %25 = vsyncadd [#allocation7], 0
      %s27 = sshll.u32 %s1, 4
      %s28 = int_to_ptr.hbm [resolvable:$true] %s27
      %s29 = sshll.u32 [#allocation6], 4
      %s30 = int_to_ptr.vmem [resolvable:$true] %s29
      %32 = dma.hbm_to_vmem [thread:$0]  %s28, 32, %s30, [#allocation7]
    $region9: #{tpu_custom_call.1} parent=1 // pred_fallthru
      _
    // Predicated region
    $region10: #{tpu_custom_call.1} parent=1 // pred_check
      _
    $region11: #{tpu_custom_call.1} parent=1 // pred_check_branch
      %34 = sbr.rel (0) target = $region13
    $region12: #{tpu_custom_call.1} parent=1 // pred_region
      %36 = vsyncadd [#allocation7], 0
      %s37 = sshll.u32 %s2, 4
      %s38 = int_to_ptr.hbm [resolvable:$true] %s37
      %s39 = sshll.u32 [#allocation8], 4
      %s40 = int_to_ptr.vmem [resolvable:$true] %s39
      %45 = dma.hbm_to_vmem [thread:$0]  %s38, 96, %s40, [#allocation7], 32, 32, 2
    $region13: #{tpu_custom_call.1} parent=1 // pred_fallthru
      _
    // Predicated region
    $region14: #{tpu_custom_call.1} parent=1 // pred_check
      _
    $region15: #{tpu_custom_call.1} parent=1 // pred_check_branch
      %47 = sbr.rel (0) target = $region17
    $region16: #{tpu_custom_call.1} parent=1 // pred_region
      %49 = dma.done [#allocation4], 32
    $region17: #{tpu_custom_call.1} parent=1 // pred_fallthru
      _
    // Predicated region
    $region18: #{tpu_custom_call.1} parent=1 // pred_check
      _
    $region19: #{tpu_custom_call.1} parent=1 // pred_check_branch
      %51 = sbr.rel (0) target = $region21
    $region20: #{tpu_custom_call.1} parent=1 // pred_region
      %53 = dma.done [#allocation7], 32
    $region21: #{tpu_custom_call.1} parent=1 // pred_fallthru
      _
    // Predicated region
    $region22: #{tpu_custom_call.1} parent=1 // pred_check
      _
    $region23: #{tpu_custom_call.1} parent=1 // pred_check_branch
      %55 = sbr.rel (0) target = $region25
    $region24: #{tpu_custom_call.1} parent=1 // pred_region
      %57 = dma.done [#allocation7], 96
    $region25: #{tpu_custom_call.1} parent=1 // pred_fallthru
      _
    %p58 = scmp.eq.s32.totalorder 0, 0
    // Predicated region
    $region26: #{tpu_custom_call.1} parent=1 // pred_check
      %p59 = pneg %p58
    $region27: #{tpu_custom_call.1} parent=1 // pred_check_branch
      %61 = sbr.rel (%p59) target = $region29
    $region28: #{tpu_custom_call.1} parent=1 // pred_region
      %s62 = scalar_lea.smem [#allocation2], 0
      %63 = sst [smem:[%s62]] 0.0
      %s64 = scalar_lea.smem [#allocation2], 1
      %65 = sst [smem:[%s64]] 0.0
      %s66 = scalar_lea.smem [#allocation2], 2
      %67 = sst [smem:[%s66]] 0.0
      %s68 = scalar_lea.smem [#allocation2], 3
      %69 = sst [smem:[%s68]] 0.0
    $region29: #{tpu_custom_call.1} parent=1 // pred_fallthru
      _
    %v70 = vld [vmem:[#allocation3] sm:$0x3]
    %v71 = vld [vmem:[#allocation6] sm:$0x3]
    %v72 = vlaneseq
    %v73 = vshrl.u32 %v72, 7
    %s74 = smul.u32 0, 2
    %v75 = vstv %s74
    %v76 = vadd.s32 %v73, %v75
    %vm77 = vcmp.lt.s32.totalorder %v76, 2
    %v78 = vmax.f32 %v70, 0.0
    %v79 = vmul.f32 %v70, %v71
    %v80 = vsub.f32 %v78, %v79
    %v81 = vand.u32 2147483647, %v70
    %v82 = vsub.f32 0.0, %v81
    %v83 = vmul.f32 %v82, 1.442695
    %v84 = vpow.pop %v83
    %v85 = vadd.f32 %v84, 1.0
    %v86 = vlog2.pop %v85
    %v87 = vmul.f32 %v86, 0.6931472
    %v88 = vmul.f32 -0.5, %v84
    %v89 = vadd.f32 %v88, 1.0
    %v90 = vmul.f32 %v89, %v84
    %v91 = vand.u32 2147483647, %v84
    %vm92 = vcmp.lt.f32.partialorder %v91, 0.0004427343
    %v93 = vsel %vm92, %v90, %v87
    %v94 = vadd.f32 %v80, %v93
    %s95 = sld [smem:[#allocation2]]
    %v96 = vsel %vm77, %v94, 0.0
    %vm97 = vcmask 58368
    %v98 = vsel %vm97, %v96, 0.0
    %99 = vadd.xlane.f32.xlu0 %v98
    %v100 = vpop.xlane.xlu0 %99
    %v101 = vrot.slane %v100, 4
    %v102 = vadd.f32 %v100, %v101
    %v103 = vrot.slane %v102, 2
    %v104 = vadd.f32 %v102, %v103
    %v105 = vrot.slane %v104, 1
    %v106 = vadd.f32 %v104, %v105
    %s107 = vtos %v106
    %s108 = sadd.f32 %s95, %s107
    %s109 = scalar_lea.smem [#allocation2], 0
    %110 = sst [smem:[%s109]] %s108
    %v111 = vld [vmem:[#allocation8] sm:$0x3]
    %v112 = vadd.f32 %v111, 1e-08
    %v113 = vlog2.pop %v112
    %v114 = vmul.f32 %v113, 0.6931472
    %s115 = sld [smem:[#allocation2 + $0x1]]
    %v116 = vsel %vm77, %v114, 0.0
    %v117 = vsel %vm97, %v116, 0.0
    %118 = vadd.xlane.f32.xlu0 %v117
    %v119 = vpop.xlane.xlu0 %118
    %v120 = vrot.slane %v119, 4
    %v121 = vadd.f32 %v119, %v120
    %v122 = vrot.slane %v121, 2
    %v123 = vadd.f32 %v121, %v122
    %v124 = vrot.slane %v123, 1
    %v125 = vadd.f32 %v123, %v124
    %s126 = vtos %v125
    %s127 = sadd.f32 %s115, %s126
    %s128 = scalar_lea.smem [#allocation2], 1
    %129 = sst [smem:[%s128]] %s127
    %s130 = scalar_lea.vmem [#allocation8], 2
    %v131 = vld [vmem:[%s130] sm:$0x3]
    %v132 = vadd.f32 %v131, 1e-08
    %v133 = vlog2.pop %v132
    %v134 = vmul.f32 %v133, 0.6931472
    %s135 = sld [smem:[#allocation2 + $0x2]]
    %v136 = vsel %vm77, %v134, 0.0
    %v137 = vsel %vm97, %v136, 0.0
    %138 = vadd.xlane.f32.xlu0 %v137
    %v139 = vpop.xlane.xlu0 %138
    %v140 = vrot.slane %v139, 4
    %v141 = vadd.f32 %v139, %v140
    %v142 = vrot.slane %v141, 2
    %v143 = vadd.f32 %v141, %v142
    %v144 = vrot.slane %v143, 1
    %v145 = vadd.f32 %v143, %v144
    %s146 = vtos %v145
    %s147 = sadd.f32 %s135, %s146
    %s148 = scalar_lea.smem [#allocation2], 2
    %149 = sst [smem:[%s148]] %s147
    %s150 = scalar_lea.vmem [#allocation8], 4
    %v151 = vld [vmem:[%s150] sm:$0x3]
    %v152 = vadd.f32 %v151, 1e-08
    %v153 = vlog2.pop %v152
    %v154 = vmul.f32 %v153, 0.6931472
    %s155 = sld [smem:[#allocation2 + $0x3]]
    %v156 = vsel %vm77, %v154, 0.0
    %v157 = vsel %vm97, %v156, 0.0
    %158 = vadd.xlane.f32.xlu0 %v157
    %v159 = vpop.xlane.xlu0 %158
    %v160 = vrot.slane %v159, 4
    %v161 = vadd.f32 %v159, %v160
    %v162 = vrot.slane %v161, 2
    %v163 = vadd.f32 %v161, %v162
    %v164 = vrot.slane %v163, 1
    %v165 = vadd.f32 %v163, %v164
    %s166 = vtos %v165
    %s167 = sadd.f32 %s155, %s166
    %s168 = scalar_lea.smem [#allocation2], 3
    %169 = sst [smem:[%s168]] %s167
    // Predicated region
    $region30: #{tpu_custom_call.1} parent=1 // pred_check
      %p170 = pneg %p58
    $region31: #{tpu_custom_call.1} parent=1 // pred_check_branch
      %172 = sbr.rel (%p170) target = $region33
    $region32: #{tpu_custom_call.1} parent=1 // pred_region
      %s173 = sld [smem:[#allocation2]]
      %s174 = scalar_lea.smem [#allocation9], 0
      %175 = sst [smem:[%s174]] %s173
      %s176 = sld [smem:[#allocation2 + $0x1]]
      %s177 = scalar_lea.smem [#allocation9], 1
      %178 = sst [smem:[%s177]] %s176
      %s179 = sld [smem:[#allocation2 + $0x2]]
      %s180 = scalar_lea.smem [#allocation9], 2
      %181 = sst [smem:[%s180]] %s179
      %s182 = sld [smem:[#allocation2 + $0x3]]
      %s183 = scalar_lea.smem [#allocation9], 3
      %184 = sst [smem:[%s183]] %s182
    $region33: #{tpu_custom_call.1} parent=1 // pred_fallthru
      _
    // Predicated region
    $region34: #{tpu_custom_call.1} parent=1 // pred_check
      _
    $region35: #{tpu_custom_call.1} parent=1 // pred_check_branch
      %186 = sbr.rel (0) target = $region37
    $region36: #{tpu_custom_call.1} parent=1 // pred_region
      %188 = vsyncadd [#allocation5], 0
      %s190 = sshll.u32 %s3, 4
      %s191 = int_to_ptr.hbm [resolvable:$true] %s190
      %193 = dma.smem_to_hbm [#allocation9], 16, %s191, [#allocation5]
    $region37: #{tpu_custom_call.1} parent=1 // pred_fallthru
      _
    // Predicated region
    $region38: #{tpu_custom_call.1} parent=1 // pred_check
      _
    $region39: #{tpu_custom_call.1} parent=1 // pred_check_branch
      %195 = sbr.rel (0) target = $region41
    $region40: #{tpu_custom_call.1} parent=1 // pred_region
      %197 = dma.done [#allocation5], 16
    $region41: #{tpu_custom_call.1} parent=1 // pred_fallthru
      _
    %198 = sfence
    %199 = vsyncpa [#allocation4], 1
    %200 = vsyncpa [#allocation7], 1
    %201 = vsyncpa [#allocation5], 1

</llo_original>
